<compile_context>
chip_gen: v5e
topology: v5e:2x2
jax: 0.10.0
libtpu: 0.0.40
codegen_flags: <defaults>
</compile_context>

<pallas_src>
import functools

import jax
import jax.numpy as jnp
import numpy as np
from jax import lax
from jax.experimental import pallas as pl
from jax.experimental.pallas import tpu as pltpu


def _vmem_capacity_bytes():
    """Physical VMEM per TensorCore, with a conservative (v7x) fallback."""
    try:
        info = pltpu.get_tpu_info()
        cap = getattr(info, "vmem_capacity_bytes", None)
        if cap:
            return int(cap)
    except Exception:
        pass
    return 64 << 20


def _draw_rects(key, B, H, W, num_mask, height, width):
    """Rectangle params, shape (B, num_mask, 4) = [h_start, w_start, h_off, w_off]."""
    hh = int(H * height)      # int(h * self.height)
    wwb = int(H * width)      # int(h * self.width)   (PyTorch uses h here too)
    k1, k2, k3, k4 = jax.random.split(key, 4)
    shape = (B, num_mask)
    h_start = jax.random.randint(k1, shape, 0, max(H - hh, 0) + 1, dtype=jnp.int32)
    w_start = jax.random.randint(k2, shape, 0, max(W - wwb, 0) + 1, dtype=jnp.int32)
    h_off = jax.random.randint(k3, shape, 0, hh + 1, dtype=jnp.int32)
    w_off = jax.random.randint(k4, shape, 0, wwb + 1, dtype=jnp.int32)
    return jnp.stack([h_start, w_start, h_off, w_off], axis=-1)


def _pick_tile(HW, C, itemsize, vmem_budget_bytes):
    """Largest spatial tile T (multiple of 128, <= HW) whose working set fits.

    Working set per 128 lanes: 4 data blocks (in+out, double-buffered) with the
    channel dim padded to the sublane minimum, plus ~6 (1,T)-shaped int32 mask
    temporaries (which are sublane-padded to 8 rows in VMEM).
    """
    if HW < 128:
        return HW        # full-extent block is always layout-legal
    sublane = max(1, 32 // itemsize)                # 8 f32 / 16 bf16 / 32 int8
    c_pad = -(-C // sublane) * sublane
    bytes_per_lane = 4 * c_pad * itemsize + 6 * 32
    n128 = max(1, min(HW // 128, vmem_budget_bytes // (bytes_per_lane * 128)))
    return int(n128) * 128


def _touched_tile_ids(rects, W, T, num_tiles, max_touched):
    """Per batch: tile ids whose flat range overlaps some rectangle's row span.

    Returns int32 (B * max_touched,): touched tiles first (ascending, distinct),
    then padded by repeating the last touched tile (or tile 0 when none are
    touched) so the padded steps are consecutive duplicates (no extra DMA) and
    idempotent identity writes.
    """
    hs, ws, ho, wo = (rects[..., i] for i in range(4))      # (B, M) each
    lo = hs * W                                             # rect flat-range start
    hi = (hs + ho) * W                                      # exclusive end
    nonempty = (ho > 0) & (wo > 0)
    t_start = jnp.arange(num_tiles, dtype=jnp.int32) * T
    t_end = t_start + T
    overlap = (nonempty[..., None]
               & (lo[..., None] < t_end[None, None, :])
               & (hi[..., None] > t_start[None, None, :]))  # (B, M, num_tiles)
    touched = jnp.any(overlap, axis=1)                      # (B, num_tiles)

    tid = jnp.arange(num_tiles, dtype=jnp.int32)
    sort_key = jnp.where(touched, tid, tid + num_tiles)     # touched first
    order = jnp.argsort(sort_key, axis=1).astype(jnp.int32)
    count = jnp.sum(touched, axis=1).astype(jnp.int32)      # (B,)

    ids = order[:, :max_touched]
    last_id = jnp.take_along_axis(order, jnp.maximum(count - 1, 0)[:, None], axis=1)
    j = jnp.arange(max_touched, dtype=jnp.int32)[None, :]
    tile_ids = jnp.where(j < count[:, None], ids, last_id)
    return tile_ids.reshape(-1)


def _masking_kernel(rect_ref, tiles_ref, x_ref, o_ref, *,
                    num_mask, max_touched, W, T, mask_value):
    """One grid step = (batch b, j-th touched spatial tile of batch b).

    rect_ref : SMEM int32 (B*num_mask*4,)  [h_start, w_start, h_off, w_off]
    tiles_ref: SMEM int32 (B*max_touched,) tile index per (batch, step)
    x_ref / o_ref: VMEM (1, C, T) block of the flattened (B, C, H*W) tensor.
    """
    b = pl.program_id(0)
    j = pl.program_id(1)
    t = tiles_ref[b * max_touched + j]

    # Flat spatial index of every element in this tile (computed once per
    # block, shared across all C channels).
    flat = t * T + lax.broadcasted_iota(jnp.int32, (1, T), 1)      # (1, T)
    if (W & (W - 1)) == 0:
        shift = W.bit_length() - 1
        rows = jnp.right_shift(flat, shift)
        cols = jnp.bitwise_and(flat, W - 1)
    else:
        rows = flat // W
        cols = flat - rows * W

    mask = jnp.zeros((1, T), dtype=jnp.bool_)
    for m in range(num_mask):  # num_mask is small and static -> unrolled
        base = b * (num_mask * 4) + m * 4
        hs = rect_ref[base + 0]
        ws = rect_ref[base + 1]
        ho = rect_ref[base + 2]
        wo = rect_ref[base + 3]
        in_rect = ((rows >= hs) & (rows < hs + ho) &
                   (cols >= ws) & (cols < ws + wo))
        mask = mask | in_rect

    xv = x_ref[...]                                # (1, C, T)
    fill = jnp.asarray(mask_value, dtype=xv.dtype)
    o_ref[...] = jnp.where(mask[:, None, :], fill, xv)


def rectangle_masking(x, key, *, num_mask, height, width, mask_value,
                      vmem_budget_bytes=None):
    """JAX/Pallas equivalent of RectangleMasking.forward.

    Functional API; the output HBM buffer aliases the input, so spatial tiles
    no rectangle touches are never moved (they keep the input values).
    """
    B, C, H, W = x.shape
    HW = H * W

    rects = _draw_rects(key, B, H, W, num_mask, height, width)   # (B, M, 4)

    itemsize = jnp.dtype(x.dtype).itemsize
    vmem_cap = _vmem_capacity_bytes()
    if vmem_budget_bytes is None:
        vmem_budget_bytes = vmem_cap // 2        # 64 MiB v5e/v6e, 32 MiB v7x
    T = _pick_tile(HW, C, itemsize, vmem_budget_bytes)
    num_tiles = (HW + T - 1) // T

    # Static upper bound on touched tiles per batch (matches the flat-range
    # overlap test used in _touched_tile_ids, so it can never be exceeded).
    hh = int(H * height)
    tiles_per_rect = (hh * W + T - 1) // T + 1
    max_touched = max(1, min(num_tiles, num_mask * tiles_per_rect))

    tile_ids = _touched_tile_ids(rects, W, T, num_tiles, max_touched)
    rects_flat = rects.reshape(-1)

    x_flat = x.reshape(B, C, HW)   # lane-dense last dim

    kernel = functools.partial(
        _masking_kernel, num_mask=num_mask, max_touched=max_touched,
        W=W, T=T, mask_value=mask_value)

    def xo_index_map(b, j, rect_ref, tiles_ref):
        # Data-dependent tile index read from SMEM (scalar prefetch, P2).
        return (b, 0, tiles_ref[b * max_touched + j])

    out_flat = pl.pallas_call(
        kernel,
        out_shape=jax.ShapeDtypeStruct((B, C, HW), x.dtype),
        grid_spec=pltpu.PrefetchScalarGridSpec(
            num_scalar_prefetch=2,          # rects, tile_ids -> SMEM
            grid=(B, max_touched),
            in_specs=[pl.BlockSpec((1, C, T), xo_index_map)],
            out_specs=pl.BlockSpec((1, C, T), xo_index_map),
        ),
        # x (operand index 2, after the two scalar-prefetch arrays) aliases
        # output 0 -> in-place semantics; untouched tiles keep the input data.
        input_output_aliases={2: 0},
        compiler_params=pltpu.CompilerParams(
            dimension_semantics=("parallel", "arbitrary"),
            vmem_limit_bytes=min(vmem_cap * 5 // 8, 100 * 1024 * 1024),
        ),
    )(rects_flat, tile_ids, x_flat)

    return out_flat.reshape(B, C, H, W)


if __name__ == "__main__":
    # cfg: num_mask=2, height=0.25, width=0.25, mask_value=0.0
    num_mask = 2
    height = 0.25
    width = 0.25
    mask_value = 0.0

    def reference(x, rects_np, mask_value):
        expected = np.asarray(x).copy()
        for bidx in range(expected.shape[0]):
            for m in range(rects_np.shape[1]):
                hs, ws, ho, wo = (int(v) for v in rects_np[bidx, m])
                expected[bidx, :, hs:hs + ho, ws:ws + wo] = mask_value
        return expected

    key = jax.random.PRNGKey(0)

    # --- Test 1: small image, single spatial tile. ---
    kx, krect, key = jax.random.split(key, 3)
    B, C, H, W = 2, 4, 16, 16
    x = jax.random.normal(kx, (B, C, H, W), dtype=jnp.float32)
    y = rectangle_masking(
        x, krect,
        num_mask=num_mask, height=height, width=width, mask_value=mask_value)
    jax.block_until_ready(y)
    assert y.shape == x.shape and y.dtype == x.dtype
    rects_np = np.asarray(_draw_rects(krect, B, H, W, num_mask, height, width))
    np.testing.assert_allclose(np.asarray(y), reference(x, rects_np, mask_value))
    assert bool(jnp.all((y == x) | (y == mask_value)))

    # --- Test 2: larger spatial extent with a tiny VMEM budget to force
    #     T=128 / 8 tiles, exercising the touched-tile-skipping + aliasing
    #     path (untouched tiles must retain the original input data). ---
    kx2, krect2 = jax.random.split(key)
    B2, C2, H2, W2 = 2, 4, 32, 32
    x2 = jax.random.normal(kx2, (B2, C2, H2, W2), dtype=jnp.float32)
    y2 = rectangle_masking(
        x2, krect2,
        num_mask=num_mask, height=height, width=width, mask_value=mask_value,
        vmem_budget_bytes=48 * 1024)
    jax.block_until_ready(y2)
    rects2_np = np.asarray(_draw_rects(krect2, B2, H2, W2, num_mask, height, width))
    np.testing.assert_allclose(np.asarray(y2), reference(x2, rects2_np, mask_value))
    assert bool(jnp.all((y2 == x2) | (y2 == mask_value)))

    print("KERNEL_OK")
</pallas_src>

<mosaic_0001>
module attributes {stable_mosaic.version = 11 : i64} {
  func.func @_masking_kernel(%arg0: i32, %arg1: i32, %arg2: memref<16xi32, #tpu.memory_space<smem>>, %arg3: memref<2xi32, #tpu.memory_space<smem>>, %arg4: memref<1x4x256xf32, #tpu.memory_space<vmem>>, %arg5: memref<1x4x256xf32, #tpu.memory_space<vmem>>) attributes {dimension_semantics = [#tpu.dimension_semantics<parallel>, #tpu.dimension_semantics<arbitrary>], iteration_bounds = array<i64: 2, 1>, scalar_prefetch = 2 : i64, scratch_operands = 0 : i64, tpu.core_type = #tpu.core_type<tc>, window_params = [{transform_indices = @transform_0, window_bounds = array<i64: 1, 4, 256>}, {transform_indices = @transform_1, window_bounds = array<i64: 1, 4, 256>}]} {
    %c1_i32 = arith.constant 1 : i32
    %0 = arith.muli %arg0, %c1_i32 : i32
    %1 = arith.addi %0, %arg1 : i32
    %2 = arith.index_cast %1 : i32 to index
    %3 = memref.load %arg3[%2] : memref<2xi32, #tpu.memory_space<smem>>
    %c256_i32 = arith.constant 256 : i32
    %4 = arith.muli %3, %c256_i32 : i32
    %5 = tpu.iota {dimensions = array<i32: 1>} : vector<1x256xi32>
    %6 = vector.broadcast %4 : i32 to vector<1x256xi32>
    %7 = arith.addi %6, %5 : vector<1x256xi32>
    %c4_i32 = arith.constant 4 : i32
    %8 = vector.broadcast %c4_i32 : i32 to vector<1x256xi32>
    %9 = arith.shrsi %7, %8 : vector<1x256xi32>
    %c15_i32 = arith.constant 15 : i32
    %10 = vector.broadcast %c15_i32 : i32 to vector<1x256xi32>
    %11 = arith.andi %7, %10 : vector<1x256xi32>
    %false = arith.constant false
    %12 = vector.broadcast %false : i1 to vector<1x256xi1>
    %c8_i32 = arith.constant 8 : i32
    %13 = arith.muli %arg0, %c8_i32 : i32
    %c0_i32 = arith.constant 0 : i32
    %14 = arith.addi %13, %c0_i32 : i32
    %c0_i32_0 = arith.constant 0 : i32
    %15 = arith.addi %14, %c0_i32_0 : i32
    %16 = arith.index_cast %15 : i32 to index
    %17 = memref.load %arg2[%16] : memref<16xi32, #tpu.memory_space<smem>>
    %c1_i32_1 = arith.constant 1 : i32
    %18 = arith.addi %14, %c1_i32_1 : i32
    %19 = arith.index_cast %18 : i32 to index
    %20 = memref.load %arg2[%19] : memref<16xi32, #tpu.memory_space<smem>>
    %c2_i32 = arith.constant 2 : i32
    %21 = arith.addi %14, %c2_i32 : i32
    %22 = arith.index_cast %21 : i32 to index
    %23 = memref.load %arg2[%22] : memref<16xi32, #tpu.memory_space<smem>>
    %c3_i32 = arith.constant 3 : i32
    %24 = arith.addi %14, %c3_i32 : i32
    %25 = arith.index_cast %24 : i32 to index
    %26 = memref.load %arg2[%25] : memref<16xi32, #tpu.memory_space<smem>>
    %27 = vector.broadcast %17 : i32 to vector<1x256xi32>
    %28 = arith.cmpi sge, %9, %27 : vector<1x256xi32>
    %29 = arith.addi %17, %23 : i32
    %30 = vector.broadcast %29 : i32 to vector<1x256xi32>
    %31 = arith.cmpi slt, %9, %30 : vector<1x256xi32>
    %32 = arith.andi %28, %31 : vector<1x256xi1>
    %33 = vector.broadcast %20 : i32 to vector<1x256xi32>
    %34 = arith.cmpi sge, %11, %33 : vector<1x256xi32>
    %35 = arith.andi %32, %34 : vector<1x256xi1>
    %36 = arith.addi %20, %26 : i32
    %37 = vector.broadcast %36 : i32 to vector<1x256xi32>
    %38 = arith.cmpi slt, %11, %37 : vector<1x256xi32>
    %39 = arith.andi %35, %38 : vector<1x256xi1>
    %40 = arith.ori %12, %39 : vector<1x256xi1>
    %c8_i32_2 = arith.constant 8 : i32
    %41 = arith.muli %arg0, %c8_i32_2 : i32
    %c4_i32_3 = arith.constant 4 : i32
    %42 = arith.addi %41, %c4_i32_3 : i32
    %c0_i32_4 = arith.constant 0 : i32
    %43 = arith.addi %42, %c0_i32_4 : i32
    %44 = arith.index_cast %43 : i32 to index
    %45 = memref.load %arg2[%44] : memref<16xi32, #tpu.memory_space<smem>>
    %c1_i32_5 = arith.constant 1 : i32
    %46 = arith.addi %42, %c1_i32_5 : i32
    %47 = arith.index_cast %46 : i32 to index
    %48 = memref.load %arg2[%47] : memref<16xi32, #tpu.memory_space<smem>>
    %c2_i32_6 = arith.constant 2 : i32
    %49 = arith.addi %42, %c2_i32_6 : i32
    %50 = arith.index_cast %49 : i32 to index
    %51 = memref.load %arg2[%50] : memref<16xi32, #tpu.memory_space<smem>>
    %c3_i32_7 = arith.constant 3 : i32
    %52 = arith.addi %42, %c3_i32_7 : i32
    %53 = arith.index_cast %52 : i32 to index
    %54 = memref.load %arg2[%53] : memref<16xi32, #tpu.memory_space<smem>>
    %55 = vector.broadcast %45 : i32 to vector<1x256xi32>
    %56 = arith.cmpi sge, %9, %55 : vector<1x256xi32>
    %57 = arith.addi %45, %51 : i32
    %58 = vector.broadcast %57 : i32 to vector<1x256xi32>
    %59 = arith.cmpi slt, %9, %58 : vector<1x256xi32>
    %60 = arith.andi %56, %59 : vector<1x256xi1>
    %61 = vector.broadcast %48 : i32 to vector<1x256xi32>
    %62 = arith.cmpi sge, %11, %61 : vector<1x256xi32>
    %63 = arith.andi %60, %62 : vector<1x256xi1>
    %64 = arith.addi %48, %54 : i32
    %65 = vector.broadcast %64 : i32 to vector<1x256xi32>
    %66 = arith.cmpi slt, %11, %65 : vector<1x256xi32>
    %67 = arith.andi %63, %66 : vector<1x256xi1>
    %68 = arith.ori %40, %67 : vector<1x256xi1>
    %c0 = arith.constant 0 : index
    %c0_8 = arith.constant 0 : index
    %c0_9 = arith.constant 0 : index
    %69 = vector.load %arg4[%c0, %c0_8, %c0_9] : memref<1x4x256xf32, #tpu.memory_space<vmem>>, vector<1x4x256xf32>
    %70 = vector.shape_cast %68 : vector<1x256xi1> to vector<1x1x256xi1>
    %cst = arith.constant 0.000000e+00 : f32
    %71 = vector.shape_cast %70 : vector<1x1x256xi1> to vector<1x1x256xi1>
    %72 = vector.broadcast %71 : vector<1x1x256xi1> to vector<1x4x256xi1>
    %73 = vector.broadcast %cst : f32 to vector<1x4x256xf32>
    %74 = arith.select %72, %73, %69 : vector<1x4x256xi1>, vector<1x4x256xf32>
    %c0_10 = arith.constant 0 : index
    %c0_11 = arith.constant 0 : index
    %c0_12 = arith.constant 0 : index
    %75 = vector.load %arg5[%c0_10, %c0_11, %c0_12] : memref<1x4x256xf32, #tpu.memory_space<vmem>>, vector<1x4x256xf32>
    tpu.vector_store %arg5[%c0_10, %c0_11, %c0_12], %74 {strides = array<i32>} : memref<1x4x256xf32, #tpu.memory_space<vmem>>, vector<1x4x256xf32>,
    return
  }
  func.func @transform_0(%arg0: i32, %arg1: i32, %arg2: memref<16xi32, #tpu.memory_space<smem>>, %arg3: memref<2xi32, #tpu.memory_space<smem>>) -> (i32, i32, i32) {
    %c1_i32 = arith.constant 1 : i32
    %0 = arith.muli %arg0, %c1_i32 : i32
    %1 = arith.addi %0, %arg1 : i32
    %2 = arith.index_cast %1 : i32 to index
    %3 = memref.load %arg3[%2] : memref<2xi32, #tpu.memory_space<smem>>
    %c0_i32 = arith.constant 0 : i32
    %c0_i32_0 = arith.constant 0 : i32
    return %arg0, %c0_i32, %3 : i32, i32, i32
  }
  func.func @transform_1(%arg0: i32, %arg1: i32, %arg2: memref<16xi32, #tpu.memory_space<smem>>, %arg3: memref<2xi32, #tpu.memory_space<smem>>) -> (i32, i32, i32) {
    %c1_i32 = arith.constant 1 : i32
    %0 = arith.muli %arg0, %c1_i32 : i32
    %1 = arith.addi %0, %arg1 : i32
    %2 = arith.index_cast %1 : i32 to index
    %3 = memref.load %arg3[%2] : memref<2xi32, #tpu.memory_space<smem>>
    %c0_i32 = arith.constant 0 : i32
    %c0_i32_0 = arith.constant 0 : i32
    return %arg0, %c0_i32, %3 : i32, i32, i32
  }
}

</mosaic_0001>

<llo_original>
// kernel: tpu_custom_call.1
$region0: #{tpu_custom_call.1}
  #allocation0 [shape = 'u32[]', space=smem, size = 0x4, offset = 0x4, fixed_abs, tag = 'smem constant byte address 0x4 - core index']
  #allocation1 [shape = 'u32[72,128]{1,0:T(1,128)}', space=vmem, size = 0x9000, scoped, tag = 'internal scratch']
  #allocation2 [shape = 's32[1]{0}', space=sflag, size = 0x4, scoped, tag = 'scoped memory for tpu_custom_call.1']
  #allocation3 [shape = 'u8[512]{0}', space=smem, size = 0x200, scoped, tag = 'prefetched SMEM operand 0']
  #allocation4 [shape = 'u8[512]{0}', space=smem, size = 0x200, scoped, tag = 'prefetched SMEM operand 1']
  %s0 = inlined_call_operand.vmem [shape: s32[16], index: 0, kind: input, shape index: {}]
  %s1 = inlined_call_operand.vmem [shape: s32[2], index: 1, kind: input, shape index: {}]
  %s2 = inlined_call_operand.hbm [shape: f32[2,4,256], index: 2, kind: input, shape index: {}, may-alias: {2,3}]
  %s3 = inlined_call_operand.hbm [shape: f32[2,4,256], index: 3, kind: output, shape index: {}, may-alias: {2,3}]
  %s4 = sld [smem:[#allocation0]]
  $region41: #{tpu_custom_call.1} parent=0
    _
  %s6 = ssub.s32 1, %s4
  %s7 = scalar_select 0, %s6, %s4
  %s9 = sshll.u32 %s0, 4
  %s10 = int_to_ptr.vmem [resolvable:$true] %s9
  %12 = dma.vmem_to_smem %s10, 16, [#allocation3], [#allocation2]
  %s14 = sshll.u32 %s1, 4
  %s15 = int_to_ptr.vmem [resolvable:$true] %s14
  %17 = dma.vmem_to_smem %s15, 16, [#allocation4], [#allocation2]
  %19 = dma.done [#allocation2], 32
  %20 = sfence
  $region1: #{tpu_custom_call.1} parent=0
    #allocation5 [shape = 'u8[8192]{0}', space=vmem, size = 0x2000, scoped, tag = 'input window, operand 2']
    #allocation6 [shape = 's32[2]{0}', space=sflag, size = 0x8, scoped, tag = 'scoped memory for tpu_custom_call.1']
    #allocation7 [shape = 's32[2]{0}', space=sflag, size = 0x8, scoped, tag = 'scoped memory for tpu_custom_call.1']
    #allocation8 [shape = 'u8[8192]{0}', space=vmem, size = 0x2000, scoped, tag = 'output window, operand 0']
    %21 = vsyncpa [#allocation6], 0
    %s22 = scalar_lea.sflag [#allocation6], 1
    %23 = vsyncpa %s22, 0
    %24 = vsyncpa [#allocation7], 0
    %s25 = scalar_lea.sflag [#allocation7], 1
    %26 = vsyncpa %s25, 0
    loop: start=0, step=1, limit=4
    $region2: #{tpu_custom_call.1} parent=1 // loop_pre_header
      _
    $region3: #{tpu_custom_call.1} parent=1 // loop_header
      %s28 = sphi 0, %s32
      %p29 = scmp.ge.s32.totalorder %s28, 4
      %s35 = sphi 0, %s47
      %s36 = sphi 0, %s43
      %s37 = sphi 0, %s35
      %s38 = sphi 0, %s36
      %s39 = sphi 0, %s37
      %s40 = sphi 0, %s38
      %s56 = sphi 0, %s58
      %s59 = sphi 0, %s56
      %s60 = sphi 0, %s59
      %s76 = sphi 0, %s60
      %s88 = sphi 0, %s90
      %s91 = sphi 0, %s88
      %s92 = sphi 0, %s91
      %s108 = sphi 0, %s92
    $region4: #{tpu_custom_call.1} parent=1 // loop_header_branch
      %31 = sbr.rel (%p29) target = $region8
    $region5: #{tpu_custom_call.1} parent=1 // loop_body
      %s33 = ssub.s32 %s28, 1
      %s34 = ssub.s32 %s28, 2
      %s41 = sadd.s32 1, %s36
      %p42 = scmp.ge.s32.totalorder %s41, 1
      %s43 = scalar_select %p42, 0, %s41
      %s44 = sadd.s32 1, %s35
      %s45 = scalar_select %p42, %s44, %s35
      %p46 = scmp.ge.s32.totalorder %s45, 2
      %s47 = scalar_select %p46, 0, %s45
      %s48 = sadd.s32 %s35, %s36
      %s49 = sld [smem:[#allocation4 + %s48]]
      %s50 = sadd.s32 %s47, %s43
      %s51 = sld [smem:[#allocation4 + %s50]]
      %s52 = ssub.s32 %s35, %s47
      %s53 = ssub.s32 %s49, %s51
      %s54 = sor.u32 %s52, %s53
      %p55 = scmp.eq.s32.totalorder %s54, 0
      %s57 = sadd.s32 %s56, 1
      %s58 = scalar_select %p55, %s56, %s57
      %p61 = pneg %p55
      %p62 = scmp.eq.s32.totalorder %s28, 1
      %p63 = por %p61, %p62
      %p64 = scmp.ne.s32.totalorder %s56, %s59
      %p65 = scmp.eq.s32.totalorder %s28, 0
      %p66 = por %p64, %p65
      %p67 = scmp.ne.s32.totalorder %s56, %s59
      %p68 = scmp.eq.s32.totalorder %s33, 1
      %p69 = por %p67, %p68
      %p70 = scmp.ne.s32.totalorder %s59, %s60
      %p71 = scmp.eq.s32.totalorder %s33, 0
      %p72 = por %p70, %p71
      %p73 = scmp.ne.s32.totalorder %s59, %s60
      %p74 = scmp.eq.s32.totalorder %s34, 1
      %p75 = por %p73, %p74
      %p77 = scmp.ne.s32.totalorder %s60, %s76
      %p78 = scmp.eq.s32.totalorder %s34, 0
      %p79 = por %p77, %p78
      %s80 = sadd.s32 %s35, %s36
      %s81 = sld [smem:[#allocation4 + %s80]]
      %s82 = sadd.s32 %s47, %s43
      %s83 = sld [smem:[#allocation4 + %s82]]
      %s84 = ssub.s32 %s35, %s47
      %s85 = ssub.s32 %s81, %s83
      %s86 = sor.u32 %s84, %s85
      %p87 = scmp.eq.s32.totalorder %s86, 0
      %s89 = sadd.s32 %s88, 1
      %s90 = scalar_select %p87, %s88, %s89
      %p93 = pneg %p87
      %p94 = scmp.eq.s32.totalorder %s28, 1
      %p95 = por %p93, %p94
      %p96 = scmp.ne.s32.totalorder %s88, %s91
      %p97 = scmp.eq.s32.totalorder %s28, 0
      %p98 = por %p96, %p97
      %p99 = scmp.ne.s32.totalorder %s88, %s91
      %p100 = scmp.eq.s32.totalorder %s33, 1
      %p101 = por %p99, %p100
      %p102 = scmp.ne.s32.totalorder %s91, %s92
      %p103 = scmp.eq.s32.totalorder %s33, 0
      %p104 = por %p102, %p103
      %p105 = scmp.ne.s32.totalorder %s91, %s92
      %p106 = scmp.eq.s32.totalorder %s34, 1
      %p107 = por %p105, %p106
      %p109 = scmp.ne.s32.totalorder %s92, %s108
      %p110 = scmp.eq.s32.totalorder %s34, 0
      %p111 = por %p109, %p110
      %p112 = scmp.le.s32.totalorder 1, %s28
      %p113 = scmp.lt.s32.totalorder %s28, 3
      %p114 = pnand %p112, %p113
      %p115 = pneg %p114
      // Predicated region
      $region9: #{tpu_custom_call.1} parent=5 // pred_check
        _
      $region10: #{tpu_custom_call.1} parent=5 // pred_check_branch
        %117 = sbr.rel (%p114) target = $region12
      $region11: #{tpu_custom_call.1} parent=5 // pred_region
        %s118 = ssub.s32 %s28, 1
      $region12: #{tpu_custom_call.1} parent=5 // pred_fallthru
        _
      %p119 = scmp.lt.s32.totalorder %s28, 2
      // Predicated region
      $region13: #{tpu_custom_call.1} parent=5 // pred_check
        %p120 = pneg %p119
      $region14: #{tpu_custom_call.1} parent=5 // pred_check_branch
        %122 = sbr.rel (%p120) target = $region16
      $region15: #{tpu_custom_call.1} parent=5 // pred_region
        // Predicated region
        $region17: #{tpu_custom_call.1} parent=15 // pred_check
          %p123 = pneg %p66
        $region18: #{tpu_custom_call.1} parent=15 // pred_check_branch
          %125 = sbr.rel (%p123) target = $region20
        $region19: #{tpu_custom_call.1} parent=15 // pred_region
          %s126 = sand.u32 %s56, 1
          %s127 = scalar_lea.sflag [#allocation6], %s126
          %s128 = sand.u32 %s56, 1
          %s129 = smul.addr %s128, 8
          %s130 = scalar_lea.vmem [#allocation5], %s129
          %s131 = sadd.s32 %s35, %s36
          %s132 = sld [smem:[#allocation4 + %s131]]
          %s133 = smul.u32 2, %s132
          %135 = vsyncadd %s127, 0
          %s136 = smul.addr %s35, 2
          %s137 = sadd.s32 %s133, %s136
          %s138 = smul.addr %s137, 4
          %s139 = scalar_lea.hbm %s2, %s138
          %s141 = sshll.u32 %s139, 4
          %s142 = int_to_ptr.hbm [resolvable:$true] %s141
          %s143 = sshll.u32 %s130, 4
          %s144 = int_to_ptr.vmem [resolvable:$true] %s143
          %146 = dma.hbm_to_vmem [thread:$0]  %s142, 128, %s144, %s127
        $region20: #{tpu_custom_call.1} parent=15 // pred_fallthru
          _
      $region16: #{tpu_custom_call.1} parent=5 // pred_fallthru
        _
      %p147 = scmp.le.s32.totalorder 1, %s28
      %p148 = scmp.lt.s32.totalorder %s28, 3
      %p149 = pnand %p147, %p148
      %p150 = pneg %p149
      // Predicated region
      $region21: #{tpu_custom_call.1} parent=5 // pred_check
        _
      $region22: #{tpu_custom_call.1} parent=5 // pred_check_branch
        %152 = sbr.rel (%p149) target = $region24
      $region23: #{tpu_custom_call.1} parent=5 // pred_region
        %s153 = ssub.s32 %s28, 1
        %s154 = sand.u32 %s59, 1
        %s155 = scalar_lea.sflag [#allocation6], %s154
        %s156 = sand.u32 %s59, 1
        %s157 = smul.addr %s156, 8
        %s158 = scalar_lea.vmem [#allocation5], %s157
        // Predicated region
        $region25: #{tpu_custom_call.1} parent=23 // pred_check
          %p159 = pneg %p72
        $region26: #{tpu_custom_call.1} parent=23 // pred_check_branch
          %161 = sbr.rel (%p159) target = $region28
        $region27: #{tpu_custom_call.1} parent=23 // pred_region
          %163 = dma.done %s155, 128
        $region28: #{tpu_custom_call.1} parent=23 // pred_fallthru
          _
        %s164 = sand.u32 %s59, 1
        %s165 = scalar_lea.sflag [#allocation6], %s164
        %s166 = sand.u32 %s59, 1
        %s167 = smul.addr %s166, 8
        %s168 = scalar_lea.vmem [#allocation5], %s167
        %p169 = pneg %p72
        %p170 = pneg %p69
        %p171 = pneg %p104
        %p172 = pneg %p101
        %s173 = sand.u32 %s91, 1
        %s174 = scalar_lea.sflag [#allocation7], %s173
        %s175 = sand.u32 %s91, 1
        %s176 = smul.addr %s175, 8
        %s177 = scalar_lea.vmem [#allocation8], %s176
        %s178 = sadd.s32 %s37, %s38
        %s179 = sld [smem:[#allocation4 + %s178]]
        %s180 = smul.u32 2, %s179
        %s181 = sadd.s32 %s37, %s38
        %s182 = sld [smem:[#allocation4 + %s181]]
        %s183 = smul.u32 2, %s182
        %s184 = sadd.s32 %s37, %s38
        %s185 = sld [smem:[#allocation4 + %s184]]
        %s186 = smul.u32 %s185, 256
        %v187 = vlaneseq
        %v188 = vand.u32 %v187, 127
        %v189 = vadd.s32 %v188, 128
        %v190 = vstv %s186
        %v191 = vadd.s32 %v190, %v188
        %v192 = vadd.s32 %v190, %v189
        %v193 = vshra.s32 %v191, 4
        %v194 = vshra.s32 %v192, 4
        %v195 = vand.u32 %v191, 15
        %v196 = vand.u32 %v192, 15
        %s197 = smul.u32 %s37, 8
        %s198 = sld [smem:[#allocation3 + %s197]]
        %s199 = sadd.s32 %s197, 1
        %s200 = sld [smem:[#allocation3 + %s199]]
        %s201 = sadd.s32 %s197, 2
        %s202 = sld [smem:[#allocation3 + %s201]]
        %s203 = sadd.s32 %s197, 3
        %s204 = sld [smem:[#allocation3 + %s203]]
        %v205 = vstv %s198
        %vm206 = vcmp.ge.s32.totalorder %v193, %v205
        %vm207 = vcmp.ge.s32.totalorder %v194, %v205
        %s208 = sadd.s32 %s198, %s202
        %v209 = vstv %s208
        %vm210 = vcmp.lt.s32.totalorder %v193, %v209
        %vm211 = vcmp.lt.s32.totalorder %v194, %v209
        %vm212 = vmand %vm206, %vm210
        %vm213 = vmand %vm207, %vm211
        %v214 = vstv %s200
        %vm215 = vcmp.ge.s32.totalorder %v195, %v214
        %vm216 = vcmp.ge.s32.totalorder %v196, %v214
        %vm217 = vmand %vm212, %vm215
        %vm218 = vmand %vm213, %vm216
        %s219 = sadd.s32 %s200, %s204
        %v220 = vstv %s219
        %vm221 = vcmp.lt.s32.totalorder %v195, %v220
        %vm222 = vcmp.lt.s32.totalorder %v196, %v220
        %vm223 = vmand %vm217, %vm221
        %vm224 = vmand %vm218, %vm222
        %s225 = sadd.s32 %s197, 4
        %s226 = sld [smem:[#allocation3 + %s225]]
        %s227 = sadd.s32 %s197, 5
        %s228 = sld [smem:[#allocation3 + %s227]]
        %s229 = sadd.s32 %s197, 6
        %s230 = sld [smem:[#allocation3 + %s229]]
        %s231 = sadd.s32 %s197, 7
        %s232 = sld [smem:[#allocation3 + %s231]]
        %v233 = vstv %s226
        %vm234 = vcmp.ge.s32.totalorder %v193, %v233
        %vm235 = vcmp.ge.s32.totalorder %v194, %v233
        %s236 = sadd.s32 %s226, %s230
        %v237 = vstv %s236
        %vm238 = vcmp.lt.s32.totalorder %v193, %v237
        %vm239 = vcmp.lt.s32.totalorder %v194, %v237
        %vm240 = vmand %vm234, %vm238
        %vm241 = vmand %vm235, %vm239
        %v242 = vstv %s228
        %vm243 = vcmp.ge.s32.totalorder %v195, %v242
        %vm244 = vcmp.ge.s32.totalorder %v196, %v242
        %vm245 = vmand %vm240, %vm243
        %vm246 = vmand %vm241, %vm244
        %s247 = sadd.s32 %s228, %s232
        %v248 = vstv %s247
        %vm249 = vcmp.lt.s32.totalorder %v195, %v248
        %vm250 = vcmp.lt.s32.totalorder %v196, %v248
        %vm251 = vmand %vm245, %vm249
        %vm252 = vmand %vm246, %vm250
        %vm253 = vmor %vm223, %vm251
        %vm254 = vmor %vm224, %vm252
        %v255 = vld [vmem:[%s158] sm:$0xff]
        %v256 = vsel %vm253, 1, 0
        %v257 = vsel %vm254, 1, 0
        %vm258 = vcmp.eq.s32.totalorder %v256, 1
        %vm259 = vcmp.eq.s32.totalorder %v257, 1
        %261 = vst [vmem:[#allocation1] ss:$2 sm:$0xff] %v255
        %v262 = vld.sshfl [vmem:[#allocation1] sm:$0xff pattern:$0x75316420]
        %v263 = vld.sshfl [vmem:[#allocation1 + $0x8] sm:$0xff pattern:$0x75316420]
        %v266 = vsel %vm258, 0.0, %v262
        %v267 = vsel %vm259, 0.0, %v263
        %v270 = vrot.slane %v267, 4
        %vm271 = vcmask 1043456
        %v272 = vsel %vm271, %v266, %v270
        %274 = vst [vmem:[%s177] sm:$0xff] %v272
        %s275 = sand.u32 %s91, 1
        %s276 = scalar_lea.sflag [#allocation7], %s275
        %s277 = sand.u32 %s91, 1
        %s278 = smul.addr %s277, 8
        %s279 = scalar_lea.vmem [#allocation8], %s278
        // Predicated region
        $region29: #{tpu_custom_call.1} parent=23 // pred_check
          %p280 = pneg %p101
        $region30: #{tpu_custom_call.1} parent=23 // pred_check_branch
          %282 = sbr.rel (%p280) target = $region32
        $region31: #{tpu_custom_call.1} parent=23 // pred_region
          %s283 = sadd.s32 %s37, %s38
          %s284 = sld [smem:[#allocation4 + %s283]]
          %s285 = smul.u32 2, %s284
          %287 = vsyncadd %s276, 0
          %s288 = smul.addr %s37, 2
          %s289 = sadd.s32 %s285, %s288
          %s290 = smul.addr %s289, 4
          %s291 = scalar_lea.hbm %s3, %s290
          %s293 = sshll.u32 %s279, 4
          %s294 = int_to_ptr.vmem [resolvable:$true] %s293
          %s295 = sshll.u32 %s291, 4
          %s296 = int_to_ptr.hbm [resolvable:$true] %s295
          %298 = dma.vmem_to_hbm [thread:$0]  %s294, 128, %s296, %s276
        $region32: #{tpu_custom_call.1} parent=23 // pred_fallthru
          _
      $region24: #{tpu_custom_call.1} parent=5 // pred_fallthru
        _
      %p299 = scmp.le.s32.totalorder 2, %s28
      // Predicated region
      $region33: #{tpu_custom_call.1} parent=5 // pred_check
        %p300 = pneg %p299
      $region34: #{tpu_custom_call.1} parent=5 // pred_check_branch
        %302 = sbr.rel (%p300) target = $region36
      $region35: #{tpu_custom_call.1} parent=5 // pred_region
        %s303 = ssub.s32 %s28, 2
        // Predicated region
        $region37: #{tpu_custom_call.1} parent=35 // pred_check
          %p304 = pneg %p107
        $region38: #{tpu_custom_call.1} parent=35 // pred_check_branch
          %306 = sbr.rel (%p304) target = $region40
        $region39: #{tpu_custom_call.1} parent=35 // pred_region
          %s307 = sand.u32 %s92, 1
          %s308 = scalar_lea.sflag [#allocation7], %s307
          %s309 = sand.u32 %s92, 1
          %s310 = smul.addr %s309, 8
          %s311 = scalar_lea.vmem [#allocation8], %s310
          %313 = dma.done %s308, 128
        $region40: #{tpu_custom_call.1} parent=35 // pred_fallthru
          _
      $region36: #{tpu_custom_call.1} parent=5 // pred_fallthru
        _
    $region6: #{tpu_custom_call.1} parent=1 // loop_footer
      %s32 = sadd.s32 1, %s28
    $region7: #{tpu_custom_call.1} parent=1 // loop_footer_branch
      %27 = sbr.rel target = $region3
    $region8: #{tpu_custom_call.1} parent=1 // loop_exit
      _
    %314 = vsyncpa [#allocation6], 1
    %s315 = scalar_lea.sflag [#allocation6], 1
    %316 = vsyncpa %s315, 1
    %317 = vsyncpa [#allocation7], 1
    %s318 = scalar_lea.sflag [#allocation7], 1
    %319 = vsyncpa %s318, 1

</llo_original>
